<compile_context>
chip_gen: v6e
topology: v6e:2x2x1
jax: 0.10.0
libtpu: 0.0.40
codegen_flags: <defaults>
</compile_context>

<pallas_src>
import functools

import jax
import jax.numpy as jnp
from jax.experimental import pallas as pl
from jax.experimental.pallas import tpu as pltpu


def _slp_kernel(x_ref, w_ref, b_ref, o_ref):
    # x_ref: (tile_m, nfeat) VMEM tile, streamed over the batch (double-buffered DMA)
    # w_ref: (1, nfeat)      VMEM row, same block every step -> stays resident
    # b_ref: (1, 1)          SMEM scalar
    # o_ref: (1, 1, tile_m)  VMEM lane-dense output row
    prod = x_ref[...] * w_ref[...]                  # VPU; stays in input dtype (bf16-native v6e/v7x)
    z = jnp.sum(prod.astype(jnp.float32), axis=-1, keepdims=True)  # f32 lane reduction (XLU)
    z = z + b_ref[0, 0]                             # scalar bias from SMEM
    # sigmoid(z) == 0.5 * (tanh(z/2) + 1): one exact EUP transcendental, VALU stays free.
    sig = 0.5 * (jnp.tanh(0.5 * z) + 1.0)           # (tile_m, 1) f32
    # Sublane column -> lane-dense row (XLU relayout, off the HBM-bound critical path)
    # so the output store is an unmasked full-lane vst + contiguous writeback DMA.
    row = jnp.transpose(sig, (1, 0)).reshape(1, 1, sig.shape[0])
    o_ref[...] = row.astype(o_ref.dtype)


def _round_up(n, m):
    return ((n + m - 1) // m) * m


def _vmem_budget():
    """Generation-aware VMEM budget / scoped limit (bytes)."""
    try:
        # 128 MiB on v5e/v6e, 64 MiB per TensorCore on v7x.
        cap = int(pltpu.get_tpu_info().vmem_capacity_bytes)
    except Exception:
        cap = 64 * 1024 * 1024                      # conservative fallback (v7x per-TC)
    budget = int(cap * 0.6)                         # resident footprint target (~40/77 MiB)
    limit = int(cap * 0.75)                         # scoped-VMEM limit, headroom for Mosaic scratch
    return budget, limit


def _choose_tile_m(batch, nfeat, itemsize, budget):
    """Pick the batch-tile row count from a byte budget (not a fixed row cap)."""
    row_bytes = _round_up(nfeat, 128) * itemsize    # VMEM rows are lane-padded to 128
    w_bytes = 2 * row_bytes                         # weight row, double-buffered
    per_row = 2 * row_bytes + 2 * itemsize          # x (2 bufs) + lane-dense out (2 bufs)
    # Target multi-MiB tiles of *useful* x bytes to amortize the ~0.35us/step fixed
    # grid overhead, capped by what fits in the per-generation VMEM budget.
    rows_target = max(8, (8 * 1024 * 1024) // max(nfeat * itemsize, 1))
    rows_budget = max(8, (budget - w_bytes) // per_row)
    rows = min(rows_target, rows_budget)
    rows = max(8, (rows // 8) * 8)
    rows = min(rows, _round_up(batch, 8))           # never exceed the (rounded-up) batch
    return int(rows)


@functools.partial(jax.jit, static_argnames=("dropout", "training"))
def slp_forward(x, w, b, *, dropout=0.0, training=False):
    """Pallas equivalent of SLP.forward(x, _): flatten -> dropout -> linear(., 1) -> sigmoid."""
    if training and dropout > 0.0:
        # TODO(synk): training-mode dropout with pltpu.prng_seed + prng_random_bits.
        raise NotImplementedError("training-mode dropout not implemented")

    batch = x.shape[0]
    x2 = x.reshape(batch, -1)                       # x.view(batch_size, -1)
    nfeat = x2.shape[1]
    w_row = w.reshape(1, nfeat)                     # (nfeat, 1) -> lane-major (1, nfeat)
    b2 = b.reshape(1, 1)

    itemsize = jnp.dtype(x2.dtype).itemsize
    budget, vmem_limit = _vmem_budget()
    tile_m = _choose_tile_m(batch, nfeat, itemsize, budget)

    # Ragged final block: no jnp.pad of x. OOB tail rows are read as garbage but their
    # outputs live in the padded tail of the output array and are dropped below.
    num_tiles = pl.cdiv(batch, tile_m)

    cost = pl.CostEstimate(
        flops=2 * batch * nfeat,
        transcendentals=batch,
        bytes_accessed=itemsize * (batch * nfeat + nfeat + 1 + batch),
    )

    out = pl.pallas_call(
        _slp_kernel,
        out_shape=jax.ShapeDtypeStruct((num_tiles, 1, tile_m), x2.dtype),
        grid=(num_tiles,),
        in_specs=[
            # x: tiled over batch; auto-pipelining double-buffers the HBM->VMEM DMA.
            # TODO(synk): sweep pipeline_mode=pl.Buffered(3) on v7x (short per-step DMAs).
            pl.BlockSpec((tile_m, nfeat), lambda i: (i, 0)),
            # w: same block every grid step -> stays VMEM-resident.
            pl.BlockSpec((1, nfeat), lambda i: (0, 0)),
            # b: SMEM scalar (no VMEM double-buffer, no vector-load slot).
            pl.BlockSpec(memory_space=pltpu.MemorySpace.SMEM),
        ],
        out_specs=pl.BlockSpec((1, 1, tile_m), lambda i: (i, 0, 0)),
        compiler_params=pltpu.CompilerParams(
            dimension_semantics=("parallel",),      # shard batch tiles across TCs (v7x)
            vmem_limit_bytes=vmem_limit,
        ),
        cost_estimate=cost,
    )(x2, w_row, b2)

    # (num_tiles, 1, tile_m) lane-dense -> (batch, 1); drops the ragged tail rows.
    return out.reshape(num_tiles * tile_m)[:batch].reshape(batch, 1)


def init_slp_params(key, nfeat, dtype=jnp.float32):
    """Deterministic init matching nn.Linear(nfeat, 1) default U(-1/sqrt(nfeat), 1/sqrt(nfeat))."""
    kw, kb = jax.random.split(key)
    bound = 1.0 / (nfeat ** 0.5)
    w = jax.random.uniform(kw, (nfeat, 1), dtype=dtype, minval=-bound, maxval=bound)
    b = jax.random.uniform(kb, (1, 1), dtype=dtype, minval=-bound, maxval=bound)
    return w, b


if __name__ == "__main__":
    key = jax.random.PRNGKey(0)
    k_x, k_p, k_x2 = jax.random.split(key, 3)

    # Small input consistent with the module: x of shape (batch, 4, 8) -> nfeat = 32.
    batch, d0, d1 = 8, 4, 8
    nfeat = d0 * d1
    x = jax.random.normal(k_x, (batch, d0, d1), dtype=jnp.float32)
    w, b = init_slp_params(k_p, nfeat)

    y = slp_forward(x, w, b, dropout=0.5, training=False)
    y = jax.block_until_ready(y)

    x_flat = x.reshape(batch, -1)
    y_ref = jax.nn.sigmoid(x_flat @ w + b)
    assert y.shape == (batch, 1)
    assert jnp.allclose(y, y_ref, atol=1e-4, rtol=1e-4), "mismatch vs reference"

    # Ragged-batch path (batch not a multiple of the tile): exercises the no-pad grid.
    batch_r = 13
    x_r = jax.random.normal(k_x2, (batch_r, d0, d1), dtype=jnp.float32)
    y_r = jax.block_until_ready(slp_forward(x_r, w, b, dropout=0.5, training=False))
    y_r_ref = jax.nn.sigmoid(x_r.reshape(batch_r, -1) @ w + b)
    assert y_r.shape == (batch_r, 1)
    assert jnp.allclose(y_r, y_r_ref, atol=1e-4, rtol=1e-4), "ragged-batch mismatch vs reference"

    print("KERNEL_OK")
</pallas_src>

<mosaic_0001>
module attributes {stable_mosaic.version = 11 : i64} {
  func.func @_slp_kernel(%arg0: i32, %arg1: memref<8x32xf32, #tpu.memory_space<vmem>>, %arg2: memref<1x32xf32, #tpu.memory_space<vmem>>, %arg3: memref<1x1xf32, #tpu.memory_space<smem>>, %arg4: memref<1x1x8xf32, #tpu.memory_space<vmem>>) attributes {dimension_semantics = [#tpu.dimension_semantics<parallel>], iteration_bounds = array<i64: 1>, scalar_prefetch = 0 : i64, scratch_operands = 0 : i64, tpu.core_type = #tpu.core_type<tc>, window_params = [{transform_indices = @transform_0, window_bounds = array<i64: 8, 32>}, {pipeline_mode = #tpu.pipeline_mode<synchronous>, transform_indices = @transform_1, window_bounds = array<i64: 1, 32>}, {transform_indices = @transform_2, window_bounds = array<i64: 1, 1>}, {transform_indices = @transform_3, window_bounds = array<i64: 1, 1, 8>}]} {
    %c0 = arith.constant 0 : index
    %c0_0 = arith.constant 0 : index
    %0 = vector.load %arg1[%c0, %c0_0] : memref<8x32xf32, #tpu.memory_space<vmem>>, vector<8x32xf32>
    %c0_1 = arith.constant 0 : index
    %c0_2 = arith.constant 0 : index
    %1 = vector.load %arg2[%c0_1, %c0_2] : memref<1x32xf32, #tpu.memory_space<vmem>>, vector<1x32xf32>
    %2 = vector.broadcast %1 : vector<1x32xf32> to vector<8x32xf32>
    %3 = arith.mulf %0, %2 : vector<8x32xf32>
    %cst = arith.constant dense<0.000000e+00> : vector<8xf32>
    %4 = vector.multi_reduction <add>, %3, %cst [1] : vector<8x32xf32> to vector<8xf32>
    %5 = vector.shape_cast %4 : vector<8xf32> to vector<8x1xf32>
    %c0_3 = arith.constant 0 : index
    %c0_4 = arith.constant 0 : index
    %6 = memref.load %arg3[%c0_3, %c0_4] : memref<1x1xf32, #tpu.memory_space<smem>>
    %7 = vector.broadcast %6 : f32 to vector<8x1xf32>
    %8 = arith.addf %5, %7 : vector<8x1xf32>
    %cst_5 = arith.constant 5.000000e-01 : f32
    %9 = vector.broadcast %cst_5 : f32 to vector<8x1xf32>
    %10 = arith.mulf %9, %8 : vector<8x1xf32>
    %11 = math.tanh %10 : vector<8x1xf32>
    %cst_6 = arith.constant 1.000000e+00 : f32
    %12 = vector.broadcast %cst_6 : f32 to vector<8x1xf32>
    %13 = arith.addf %11, %12 : vector<8x1xf32>
    %cst_7 = arith.constant 5.000000e-01 : f32
    %14 = vector.broadcast %cst_7 : f32 to vector<8x1xf32>
    %15 = arith.mulf %14, %13 : vector<8x1xf32>
    %16 = tpu.transpose %15, [1, 0] : vector<8x1xf32> -> vector<1x8xf32>
    %17 = vector.shape_cast %16 : vector<1x8xf32> to vector<1x1x8xf32>
    %c0_8 = arith.constant 0 : index
    %c0_9 = arith.constant 0 : index
    %c0_10 = arith.constant 0 : index
    %18 = vector.load %arg4[%c0_8, %c0_9, %c0_10] : memref<1x1x8xf32, #tpu.memory_space<vmem>>, vector<1x1x8xf32>
    tpu.vector_store %arg4[%c0_8, %c0_9, %c0_10], %17 {strides = array<i32>} : memref<1x1x8xf32, #tpu.memory_space<vmem>>, vector<1x1x8xf32>,
    return
  }
  func.func @transform_0(%arg0: i32) -> (i32, i32) {
    %c0_i32 = arith.constant 0 : i32
    %c0_i32_0 = arith.constant 0 : i32
    return %arg0, %c0_i32 : i32, i32
  }
  func.func @transform_1(%arg0: i32) -> (i32, i32) {
    %c0_i32 = arith.constant 0 : i32
    %c0_i32_0 = arith.constant 0 : i32
    %c0_i32_1 = arith.constant 0 : i32
    return %c0_i32, %c0_i32_0 : i32, i32
  }
  func.func @transform_2(%arg0: i32) -> (i32, i32) {
    %c0_i32 = arith.constant 0 : i32
    %c0_i32_0 = arith.constant 0 : i32
    %c0_i32_1 = arith.constant 0 : i32
    return %c0_i32, %c0_i32_0 : i32, i32
  }
  func.func @transform_3(%arg0: i32) -> (i32, i32, i32) {
    %c0_i32 = arith.constant 0 : i32
    %c0_i32_0 = arith.constant 0 : i32
    %c0_i32_1 = arith.constant 0 : i32
    return %arg0, %c0_i32, %c0_i32_0 : i32, i32, i32
  }
}

</mosaic_0001>

<llo_original>
// kernel: slp_forward.1
$region0: #{slp_forward.1}
  #allocation0 [shape = 'u32[]', space=smem, size = 0x4, offset = 0x4, fixed_abs, tag = 'smem constant byte address 0x4 - core index']
  #allocation1 [shape = 'u32[144,128]{1,0:T(1,128)}', space=vmem, size = 0x12000, scoped, tag = 'internal scratch']
  #allocation2 [shape = 'f32[1,1]{1,0:T(1,128)S(6)}', space=smem, size = 0x200, scoped, tag = 'scoped memory for slp_forward.1']
  %s0 = inlined_call_operand.vmem [shape: f32[8,32], index: 0, kind: input, shape index: {}]
  %s1 = inlined_call_operand.vmem [shape: f32[1,32], index: 1, kind: input, shape index: {}]
  %s2 = inlined_call_operand.<no memory space> [shape: f32[1,1], index: 2, kind: input, shape index: {}]
  %s3 = inlined_call_operand.hbm [shape: f32[1,1,8], index: 3, kind: output, shape index: {}]
  %s4 = sld [smem:[#allocation0]]
  $region22: #{slp_forward.1} parent=0
    _
  %s6 = ssub.s32 1, %s4
  %s7 = scalar_select 0, %s6, %s4
  %8 = sst [smem:[#allocation2]] %s2
  $region1: #{slp_forward.1} parent=0
    #allocation3 [shape = 'u8[512]{0}', space=vmem, size = 0x400, scoped, tag = 'output window, operand 0, single buffered']
    #allocation4 [shape = 's32[1]{0}', space=sflag, size = 0x4, scoped, tag = 'scoped memory for slp_forward.1']
    %9 = vsyncpa [#allocation4], 0
    // Predicated region
    $region2: #{slp_forward.1} parent=1 // pred_check
      _
    $region3: #{slp_forward.1} parent=1 // pred_check_branch
      %11 = sbr.rel (0) target = $region5
    $region4: #{slp_forward.1} parent=1 // pred_region
      _
    $region5: #{slp_forward.1} parent=1 // pred_fallthru
      _
    // Predicated region
    $region6: #{slp_forward.1} parent=1 // pred_check
      _
    $region7: #{slp_forward.1} parent=1 // pred_check_branch
      %13 = sbr.rel (0) target = $region9
    $region8: #{slp_forward.1} parent=1 // pred_region
      _
    $region9: #{slp_forward.1} parent=1 // pred_fallthru
      _
    // Predicated region
    $region10: #{slp_forward.1} parent=1 // pred_check
      _
    $region11: #{slp_forward.1} parent=1 // pred_check_branch
      %15 = sbr.rel (0) target = $region13
    $region12: #{slp_forward.1} parent=1 // pred_region
      _
    $region13: #{slp_forward.1} parent=1 // pred_fallthru
      _
    %v16 = vld [vmem:[%s0] sm:$0xff]
    %v17 = vld [vmem:[%s1] sm:$0x1]
    %v19 = vlaneseq
    %v20 = vshrl.u32 %v19, 7
    %v21 = vsub.s32 0, %v20
    %v22 = vrot.slane %v17, %v21
    %v24 = vmul.f32 %v16, %v22
    %vm25 = vcmask 261120
    %v26 = vsel %vm25, %v24, 0.0
    %27 = vadd.xlane.f32.xlu0 %v26
    %v28 = vpop.xlane.xlu0 %27
    %s29 = sld [smem:[#allocation2]]
    %v30 = vstv %s29
    %v31 = vadd.f32 %v28, %v30
    %v32 = vmul.f32 %v31, 0.5
    %v33 = vtanh.pop %v32
    %v34 = vadd.f32 %v33, 1.0
    %v35 = vmul.f32 %v34, 0.5
    %36 = vxpose.xlu0.b32.start [1/16] %v35, 128
    %37 = vxpose.xlu0.b32.cont [2/16] 0.0, 128
    %38 = vxpose.xlu0.b32.cont [3/16] 0.0, 128
    %39 = vxpose.xlu0.b32.cont [4/16] 0.0, 128
    %40 = vxpose.xlu0.b32.cont [5/16] 0.0, 128
    %41 = vxpose.xlu0.b32.cont [6/16] 0.0, 128
    %42 = vxpose.xlu0.b32.cont [7/16] 0.0, 128
    %43 = vxpose.xlu0.b32.cont [8/16] 0.0, 128
    %44 = vxpose.xlu0.b32.cont [9/16] 0.0, 128
    %45 = vxpose.xlu0.b32.cont [10/16] 0.0, 128
    %46 = vxpose.xlu0.b32.cont [11/16] 0.0, 128
    %47 = vxpose.xlu0.b32.cont [12/16] 0.0, 128
    %48 = vxpose.xlu0.b32.cont [13/16] 0.0, 128
    %49 = vxpose.xlu0.b32.cont [14/16] 0.0, 128
    %50 = vxpose.xlu0.b32.cont [15/16] 0.0, 128
    %51 = vxpose.xlu0.b32.end [16/16] 0.0, 128
    %v52 = vpop.trf.xlu0
    %v53 = vpop.trf.xlu0
    %v54 = vpop.trf.xlu0
    %v55 = vpop.trf.xlu0
    %v56 = vpop.trf.xlu0
    %v57 = vpop.trf.xlu0
    %v58 = vpop.trf.xlu0
    %v59 = vpop.trf.xlu0
    %v60 = vpop.trf.xlu0
    %v61 = vpop.trf.xlu0
    %v62 = vpop.trf.xlu0
    %v63 = vpop.trf.xlu0
    %v64 = vpop.trf.xlu0
    %v65 = vpop.trf.xlu0
    %v66 = vpop.trf.xlu0
    %v67 = vpop.trf.xlu0
    %vm68 = vcmask 57344
    %69 = vst.msk [vmem:[#allocation3] sm:$0x1] %vm68, %v52
    // Predicated region
    $region14: #{slp_forward.1} parent=1 // pred_check
      _
    $region15: #{slp_forward.1} parent=1 // pred_check_branch
      %71 = sbr.rel (0) target = $region17
    $region16: #{slp_forward.1} parent=1 // pred_region
      %s73 = ssub.s32 16, 16
      %74 = vsyncadd [#allocation4], %s73
      %s76 = sshll.u32 [#allocation3], 4
      %s77 = int_to_ptr.vmem [resolvable:$true] %s76
      %79 = dma.vmem_to_hbm [thread:$0]  %s77, 16, %s3, [#allocation4]
    $region17: #{slp_forward.1} parent=1 // pred_fallthru
      _
    // Predicated region
    $region18: #{slp_forward.1} parent=1 // pred_check
      _
    $region19: #{slp_forward.1} parent=1 // pred_check_branch
      %81 = sbr.rel (0) target = $region21
    $region20: #{slp_forward.1} parent=1 // pred_region
      %82 = dma.done [#allocation4], 16
    $region21: #{slp_forward.1} parent=1 // pred_fallthru
      _
    %83 = vsyncpa [#allocation4], 1

</llo_original>
